<compile_context>
chip_gen: v5e
topology: v5e:2x2
jax: 0.10.0
libtpu: 0.0.40
codegen_flags: <defaults>
</compile_context>

<pallas_src>
import functools

import jax
import jax.numpy as jnp
from jax.experimental import pallas as pl
from jax.experimental.pallas import tpu as pltpu

OUT_PAD = 128  # lane-dense output width; real logits live in lanes [0, out_dim)


def mlp_kernel(x_ref, w1_ref, tail_ref, o_ref, *, h1, h2):
    # Row layout of tail_ref (f32, lane-padded to OUT_PAD=128 lanes):
    #   row 0                 : c1  = b1*s1 + t1   (lanes [0, h1))
    #   rows 1 .. 1+h1        : W2' = w2 * s2      (lanes [0, h2))
    #   row 1+h1              : c2  = b2*s2 + t2   (lanes [0, h2))
    #   rows 2+h1 .. 2+h1+h2  : W3  zero-padded to OUT_PAD lanes
    #   row 2+h1+h2           : b3  zero-padded to OUT_PAD lanes
    r_c1 = 0
    r_w2 = 1
    r_c2 = 1 + h1
    r_w3 = 2 + h1
    r_b3 = 2 + h1 + h2

    # fc1 (+ folded bn1) -> relu.  bf16 inputs, f32 MXU accumulation.
    x = x_ref[...].astype(jnp.bfloat16)
    h = jnp.dot(x, w1_ref[...], preferred_element_type=jnp.float32)
    h = jnp.maximum(h + tail_ref[r_c1:r_c1 + 1, :h1], 0.0)            # (B, h1)

    # fc2 (+ folded bn2) -> relu.   (dropout = identity in eval mode)
    h = jnp.dot(h, tail_ref[r_w2:r_w2 + h1, :h2],
                preferred_element_type=jnp.float32)
    h = jnp.maximum(h + tail_ref[r_c2:r_c2 + 1, :h2], 0.0)            # (B, h2)

    # fc3 — output lane-padded to OUT_PAD so the final store is lane-dense.
    o_ref[...] = (jnp.dot(h, tail_ref[r_w3:r_w3 + h2, :],
                          preferred_element_type=jnp.float32)
                  + tail_ref[r_b3:r_b3 + 1, :])


def prepare_params(params, eps=1e-5, out_pad=OUT_PAD):
    """ONE-TIME preprocessing (call once, reuse the result for every call).

    Folds eval-mode BatchNorm running stats and the Linear biases into the
    weights, casts the dominant fc1 weight to bf16, and packs every small
    remaining operand into a single lane-padded f32 slab.
    Returns (w1f_bf16, slab_f32, dims) with dims = static ints for the
    jitted forward.
    """
    (w1, b1, g1, be1, rm1, rv1,
     w2, b2, g2, be2, rm2, rv2,
     w3, b3) = params
    h1 = w1.shape[1]
    h2 = w2.shape[1]
    out_dim = w3.shape[1]
    assert out_dim <= out_pad

    s1 = g1 / jnp.sqrt(rv1 + eps)
    t1 = be1 - rm1 * s1
    s2 = g2 / jnp.sqrt(rv2 + eps)
    t2 = be2 - rm2 * s2

    w1f = (w1 * s1[None, :]).astype(jnp.bfloat16)      # (in, h1), BN1-folded
    c1 = b1 * s1 + t1                                  # (h1,)
    w2f = w2 * s2[None, :]                             # (h1, h2), BN2-folded
    c2 = b2 * s2 + t2                                  # (h2,)

    rows = 3 + h1 + h2
    slab = jnp.zeros((rows, out_pad), jnp.float32)
    slab = slab.at[0, :h1].set(c1)
    slab = slab.at[1:1 + h1, :h2].set(w2f)
    slab = slab.at[1 + h1, :h2].set(c2)
    slab = slab.at[2 + h1:2 + h1 + h2, :out_dim].set(w3)
    slab = slab.at[2 + h1 + h2, :out_dim].set(b3)

    dims = dict(h1=h1, h2=h2, out_dim=out_dim)
    return w1f, slab, dims


@functools.partial(jax.jit, static_argnames=("h1", "h2", "out_dim"))
def mlp_classifier_forward(x, w1f, slab, *, h1, h2, out_dim):
    """Per-inference path: a single pallas_call (+ trivial lane slice)."""
    B, in_dim = x.shape
    kernel = functools.partial(mlp_kernel, h1=h1, h2=h2)
    vmem = pl.BlockSpec(memory_space=pltpu.MemorySpace.VMEM)

    flops = 2 * B * (in_dim * h1 + h1 * h2 + h2 * OUT_PAD)
    bytes_accessed = (x.size * x.dtype.itemsize
                      + w1f.size * 2                 # bf16 fc1 weight
                      + slab.size * 4                # packed f32 slab
                      + B * OUT_PAD * 4)             # lane-dense output

    out = pl.pallas_call(
        kernel,
        out_shape=jax.ShapeDtypeStruct((B, OUT_PAD), jnp.float32),
        in_specs=[vmem, vmem, vmem],
        out_specs=vmem,
        cost_estimate=pl.CostEstimate(flops=flops, transcendentals=0,
                                      bytes_accessed=bytes_accessed),
    )(x, w1f, slab)
    return out[:, :out_dim]


def mlp_reference(x, params):
    (w1, b1, g1, be1, rm1, rv1,
     w2, b2, g2, be2, rm2, rv2,
     w3, b3) = params
    eps = 1e-5
    h = x.astype(jnp.float32) @ w1 + b1
    h = g1 * (h - rm1) / jnp.sqrt(rv1 + eps) + be1
    h = jnp.maximum(h, 0.0)
    h = h @ w2 + b2
    h = g2 * (h - rm2) / jnp.sqrt(rv2 + eps) + be2
    h = jnp.maximum(h, 0.0)
    return h @ w3 + b3


def init_params(key, input_dim, output_dim):
    h1 = input_dim // 10
    h2 = input_dim // 100
    assert h2 > 0, "input_dim must be >= 100 to avoid zero-width hidden layer"
    ks = jax.random.split(key, 10)
    # Linear weights stored as (in, out).
    w1 = jax.random.normal(ks[0], (input_dim, h1), jnp.float32) * 0.05
    b1 = jax.random.normal(ks[1], (h1,), jnp.float32) * 0.05
    w2 = jax.random.normal(ks[2], (h1, h2), jnp.float32) * 0.05
    b2 = jax.random.normal(ks[3], (h2,), jnp.float32) * 0.05
    w3 = jax.random.normal(ks[4], (h2, output_dim), jnp.float32) * 0.05
    b3 = jax.random.normal(ks[5], (output_dim,), jnp.float32) * 0.05
    # BatchNorm1d params / running stats (deterministic, non-trivial).
    g1 = 1.0 + 0.1 * jax.random.normal(ks[6], (h1,), jnp.float32)
    be1 = 0.1 * jax.random.normal(ks[7], (h1,), jnp.float32)
    rm1 = 0.1 * jax.random.normal(ks[8], (h1,), jnp.float32)
    rv1 = 0.5 + jax.random.uniform(ks[9], (h1,), jnp.float32)
    g2 = jnp.linspace(0.9, 1.1, h2, dtype=jnp.float32)
    be2 = jnp.linspace(-0.1, 0.1, h2, dtype=jnp.float32)
    rm2 = jnp.linspace(-0.05, 0.05, h2, dtype=jnp.float32)
    rv2 = jnp.linspace(0.8, 1.2, h2, dtype=jnp.float32)
    return (w1, b1, g1, be1, rm1, rv1,
            w2, b2, g2, be2, rm2, rv2,
            w3, b3)


if __name__ == "__main__":
    input_dim = 400    # -> hidden dims 40 and 4 (input_dim // 10, input_dim // 100)
    output_dim = 6
    batch = 16

    key = jax.random.PRNGKey(0)
    k_x, k_p = jax.random.split(key)
    x = jax.random.normal(k_x, (batch, input_dim), jnp.float32)
    params = init_params(k_p, input_dim, output_dim)

    # One-time parameter preprocessing (BN fold + bf16 cast + packing).
    w1f, slab, dims = prepare_params(params)
    w1f, slab = jax.block_until_ready((w1f, slab))

    out = mlp_classifier_forward(x, w1f, slab, **dims)
    out = jax.block_until_ready(out)

    ref = mlp_reference(x, params)
    assert out.shape == (batch, output_dim)
    # bf16 fc1 weights -> loosened tolerance vs the f32 reference.
    assert jnp.allclose(out, ref, atol=2e-2, rtol=2e-2), "mismatch vs JAX reference"

    print("KERNEL_OK")
</pallas_src>

<mosaic_0001>
module attributes {stable_mosaic.version = 11 : i64} {
  func.func @mlp_kernel(%arg0: memref<16x400xf32, #tpu.memory_space<vmem>>, %arg1: memref<400x40xbf16, #tpu.memory_space<vmem>>, %arg2: memref<47x128xf32, #tpu.memory_space<vmem>>, %arg3: memref<16x128xf32, #tpu.memory_space<vmem>>) attributes {dimension_semantics = [], scalar_prefetch = 0 : i64, scratch_operands = 0 : i64, tpu.core_type = #tpu.core_type<tc>} {
    %c0 = arith.constant 0 : index
    %c0_0 = arith.constant 0 : index
    %0 = vector.load %arg0[%c0, %c0_0] : memref<16x400xf32, #tpu.memory_space<vmem>>, vector<16x400xf32>
    %1 = arith.truncf %0 : vector<16x400xf32> to vector<16x400xbf16>
    %c0_1 = arith.constant 0 : index
    %c0_2 = arith.constant 0 : index
    %2 = vector.load %arg1[%c0_1, %c0_2] : memref<400x40xbf16, #tpu.memory_space<vmem>>, vector<400x40xbf16>
    %cst = arith.constant dense<0.000000e+00> : vector<16x40xf32>
    %3 = tpu.matmul %1, %2, %cst {dimension_numbers = #tpu.dot_dimension_numbers<[1], [0], [0], [1], [0, 0, 1, 1], [], []>} : vector<16x400xbf16>, vector<400x40xbf16>, vector<16x40xf32> -> vector<16x40xf32>
    %c0_3 = arith.constant 0 : index
    %c0_4 = arith.constant 0 : index
    %4 = vector.load %arg2[%c0_3, %c0_4] : memref<47x128xf32, #tpu.memory_space<vmem>>, vector<1x40xf32>
    %5 = vector.broadcast %4 : vector<1x40xf32> to vector<16x40xf32>
    %6 = arith.addf %3, %5 : vector<16x40xf32>
    %cst_5 = arith.constant 0.000000e+00 : f32
    %7 = vector.broadcast %cst_5 : f32 to vector<16x40xf32>
    %8 = arith.maximumf %6, %7 : vector<16x40xf32>
    %c1 = arith.constant 1 : index
    %c0_6 = arith.constant 0 : index
    %9 = vector.load %arg2[%c1, %c0_6] : memref<47x128xf32, #tpu.memory_space<vmem>>, vector<40x4xf32>
    %cst_7 = arith.constant dense<0.000000e+00> : vector<16x4xf32>
    %10 = tpu.matmul %8, %9, %cst_7 {dimension_numbers = #tpu.dot_dimension_numbers<[1], [0], [0], [1], [0, 0, 1, 1], [], []>} : vector<16x40xf32>, vector<40x4xf32>, vector<16x4xf32> -> vector<16x4xf32>
    %c41 = arith.constant 41 : index
    %c0_8 = arith.constant 0 : index
    %11 = vector.load %arg2[%c41, %c0_8] : memref<47x128xf32, #tpu.memory_space<vmem>>, vector<1x4xf32>
    %12 = vector.broadcast %11 : vector<1x4xf32> to vector<16x4xf32>
    %13 = arith.addf %10, %12 : vector<16x4xf32>
    %cst_9 = arith.constant 0.000000e+00 : f32
    %14 = vector.broadcast %cst_9 : f32 to vector<16x4xf32>
    %15 = arith.maximumf %13, %14 : vector<16x4xf32>
    %c42 = arith.constant 42 : index
    %c0_10 = arith.constant 0 : index
    %16 = vector.load %arg2[%c42, %c0_10] : memref<47x128xf32, #tpu.memory_space<vmem>>, vector<4x128xf32>
    %cst_11 = arith.constant dense<0.000000e+00> : vector<16x128xf32>
    %17 = tpu.matmul %15, %16, %cst_11 {dimension_numbers = #tpu.dot_dimension_numbers<[1], [0], [0], [1], [0, 0, 1, 1], [], []>} : vector<16x4xf32>, vector<4x128xf32>, vector<16x128xf32> -> vector<16x128xf32>
    %c46 = arith.constant 46 : index
    %c0_12 = arith.constant 0 : index
    %18 = vector.load %arg2[%c46, %c0_12] : memref<47x128xf32, #tpu.memory_space<vmem>>, vector<1x128xf32>
    %19 = vector.broadcast %18 : vector<1x128xf32> to vector<16x128xf32>
    %20 = arith.addf %17, %19 : vector<16x128xf32>
    %c0_13 = arith.constant 0 : index
    %c0_14 = arith.constant 0 : index
    %21 = vector.load %arg3[%c0_13, %c0_14] : memref<16x128xf32, #tpu.memory_space<vmem>>, vector<16x128xf32>
    tpu.vector_store %arg3[%c0_13, %c0_14], %20 {strides = array<i32>} : memref<16x128xf32, #tpu.memory_space<vmem>>, vector<16x128xf32>,
    return
  }
}

</mosaic_0001>

<llo_original>
// kernel: mlp_classifier_forward.1
$region0: #{mlp_classifier_forward.1}
  #allocation0 [shape = 'u32[]', space=smem, size = 0x4, offset = 0x4, fixed_abs, tag = 'smem constant byte address 0x4 - core index']
  #allocation1 [shape = 'u32[72,128]{1,0:T(1,128)}', space=vmem, size = 0x9000, scoped, tag = 'internal scratch']
  %s0 = inlined_call_operand.vmem [shape: f32[16,400], index: 0, kind: input, shape index: {}]
  %s1 = inlined_call_operand.vmem [shape: bf16[400,40], index: 1, kind: input, shape index: {}]
  %s2 = inlined_call_operand.vmem [shape: f32[47,128], index: 2, kind: input, shape index: {}]
  %s3 = inlined_call_operand.vmem [shape: f32[16,128], index: 3, kind: output, shape index: {}]
  %s4 = sld [smem:[#allocation0]]
  $region22: #{mlp_classifier_forward.1} parent=0
    _
  %s6 = ssub.s32 1, %s4
  %s7 = scalar_select 0, %s6, %s4
  // Predicated region
  $region2: #{mlp_classifier_forward.1} parent=0 // pred_check
    _
  $region3: #{mlp_classifier_forward.1} parent=0 // pred_check_branch
    %9 = sbr.rel (0) target = $region5
  $region4: #{mlp_classifier_forward.1} parent=0 // pred_region
    _
  $region5: #{mlp_classifier_forward.1} parent=0 // pred_fallthru
    _
  // Predicated region
  $region6: #{mlp_classifier_forward.1} parent=0 // pred_check
    _
  $region7: #{mlp_classifier_forward.1} parent=0 // pred_check_branch
    %11 = sbr.rel (0) target = $region9
  $region8: #{mlp_classifier_forward.1} parent=0 // pred_region
    _
  $region9: #{mlp_classifier_forward.1} parent=0 // pred_fallthru
    _
  // Predicated region
  $region10: #{mlp_classifier_forward.1} parent=0 // pred_check
    _
  $region11: #{mlp_classifier_forward.1} parent=0 // pred_check_branch
    %13 = sbr.rel (0) target = $region13
  $region12: #{mlp_classifier_forward.1} parent=0 // pred_region
    _
  $region13: #{mlp_classifier_forward.1} parent=0 // pred_fallthru
    _
  %v15 = vld [vmem:[%s0] sm:$0xff]
  %v16 = vld [vmem:[%s0 + $0x8] sm:$0xff]
  %v17 = vld [vmem:[%s0 + $0x10] sm:$0xff]
  %v18 = vld [vmem:[%s0 + $0x18] sm:$0xff]
  %v19 = vld [vmem:[%s0 + $0x20] sm:$0xff]
  %v20 = vld [vmem:[%s0 + $0x28] sm:$0xff]
  %v21 = vld [vmem:[%s0 + $0x30] sm:$0xff]
  %v22 = vld [vmem:[%s0 + $0x38] sm:$0xff]
  %v23 = vpack.c.bf16 %v19, %v15
  %v24 = vpack.c.bf16 %v20, %v16
  %v25 = vpack.c.bf16 %v21, %v17
  %v26 = vpack.c.bf16 %v22, %v18
  %v27 = vld [vmem:[%s1] sm:$0xf]
  %v28 = vld [vmem:[%s1 + $0x4] sm:$0xf]
  %v29 = vld [vmem:[%s1 + $0x8] sm:$0xf]
  %v30 = vld [vmem:[%s1 + $0xc] sm:$0xf]
  %v31 = vld [vmem:[%s1 + $0x10] sm:$0xf]
  %v32 = vld [vmem:[%s1 + $0x14] sm:$0xf]
  %v33 = vld [vmem:[%s1 + $0x18] sm:$0xf]
  %v34 = vld [vmem:[%s1 + $0x1c] sm:$0xf]
  %v35 = vld [vmem:[%s1 + $0x20] sm:$0xf]
  %v36 = vld [vmem:[%s1 + $0x24] sm:$0xf]
  %v37 = vld [vmem:[%s1 + $0x28] sm:$0xf]
  %v38 = vld [vmem:[%s1 + $0x2c] sm:$0xf]
  %v39 = vld [vmem:[%s1 + $0x30] sm:$0xf]
  %v40 = vld [vmem:[%s1 + $0x34] sm:$0xf]
  %v41 = vld [vmem:[%s1 + $0x38] sm:$0xf]
  %v42 = vld [vmem:[%s1 + $0x3c] sm:$0xf]
  %v43 = vld [vmem:[%s1 + $0x40] sm:$0xf]
  %v44 = vld [vmem:[%s1 + $0x44] sm:$0xf]
  %v45 = vld [vmem:[%s1 + $0x48] sm:$0xf]
  %v46 = vld [vmem:[%s1 + $0x4c] sm:$0xf]
  %v47 = vld [vmem:[%s1 + $0x50] sm:$0xf]
  %v48 = vld [vmem:[%s1 + $0x54] sm:$0xf]
  %v49 = vld [vmem:[%s1 + $0x58] sm:$0xf]
  %v50 = vld [vmem:[%s1 + $0x5c] sm:$0xf]
  %v51 = vld [vmem:[%s1 + $0x60] sm:$0xf]
  %v52 = vld [vmem:[%s1 + $0x64] sm:$0xf]
  %v53 = vld [vmem:[%s1 + $0x68] sm:$0xf]
  %v54 = vld [vmem:[%s1 + $0x6c] sm:$0xf]
  %v55 = vld [vmem:[%s1 + $0x70] sm:$0xf]
  %v56 = vld [vmem:[%s1 + $0x74] sm:$0xf]
  %v57 = vld [vmem:[%s1 + $0x78] sm:$0xf]
  %v58 = vld [vmem:[%s1 + $0x7c] sm:$0xf]
  %v59 = vld [vmem:[%s1 + $0x80] sm:$0xf]
  %v60 = vld [vmem:[%s1 + $0x84] sm:$0xf]
  %v61 = vld [vmem:[%s1 + $0x88] sm:$0xf]
  %v62 = vld [vmem:[%s1 + $0x8c] sm:$0xf]
  %v63 = vld [vmem:[%s1 + $0x90] sm:$0xf]
  %v64 = vld [vmem:[%s1 + $0x94] sm:$0xf]
  %v65 = vld [vmem:[%s1 + $0x98] sm:$0xf]
  %v66 = vld [vmem:[%s1 + $0x9c] sm:$0xf]
  %v67 = vld [vmem:[%s1 + $0xa0] sm:$0xf]
  %v68 = vld [vmem:[%s1 + $0xa4] sm:$0xf]
  %v69 = vld [vmem:[%s1 + $0xa8] sm:$0xf]
  %v70 = vld [vmem:[%s1 + $0xac] sm:$0xf]
  %v71 = vld [vmem:[%s1 + $0xb0] sm:$0xf]
  %v72 = vld [vmem:[%s1 + $0xb4] sm:$0xf]
  %v73 = vld [vmem:[%s1 + $0xb8] sm:$0xf]
  %v74 = vld [vmem:[%s1 + $0xbc] sm:$0xf]
  %v75 = vld [vmem:[%s1 + $0xc0] sm:$0xf]
  %v76 = vld [vmem:[%s1 + $0xc4] sm:$0xf]
  %v77 = vld [vmem:[%s2] sm:$0x1]
  %v78 = vperm.slane %v77, 0
  %v129 = vunpack.c.l.b16 %v27
  %v130 = vunpack.c.l.b16 %v28
  %v131 = vunpack.c.l.b16 %v29
  %v132 = vunpack.c.l.b16 %v30
  %v133 = vunpack.c.l.b16 %v31
  %v134 = vunpack.c.l.b16 %v32
  %v135 = vunpack.c.l.b16 %v33
  %v136 = vunpack.c.l.b16 %v34
  %v137 = vunpack.c.l.b16 %v35
  %v138 = vunpack.c.l.b16 %v36
  %v139 = vunpack.c.l.b16 %v37
  %v140 = vunpack.c.l.b16 %v38
  %v141 = vunpack.c.l.b16 %v39
  %v142 = vunpack.c.l.b16 %v40
  %v143 = vunpack.c.l.b16 %v41
  %v144 = vunpack.c.l.b16 %v42
  %v145 = vunpack.c.l.b16 %v43
  %v146 = vunpack.c.l.b16 %v44
  %v147 = vunpack.c.l.b16 %v45
  %v148 = vunpack.c.l.b16 %v46
  %v149 = vunpack.c.l.b16 %v47
  %v150 = vunpack.c.l.b16 %v48
  %v151 = vunpack.c.l.b16 %v49
  %v152 = vunpack.c.l.b16 %v50
  %v153 = vunpack.c.l.b16 %v51
  %v154 = vunpack.c.l.b16 %v52
  %v155 = vunpack.c.l.b16 %v53
  %v156 = vunpack.c.l.b16 %v54
  %v157 = vunpack.c.l.b16 %v55
  %v158 = vunpack.c.l.b16 %v56
  %v159 = vunpack.c.l.b16 %v57
  %v160 = vunpack.c.l.b16 %v58
  %v161 = vunpack.c.l.b16 %v59
  %v162 = vunpack.c.l.b16 %v60
  %v163 = vunpack.c.l.b16 %v61
  %v164 = vunpack.c.l.b16 %v62
  %v165 = vunpack.c.l.b16 %v63
  %v166 = vunpack.c.l.b16 %v64
  %v167 = vunpack.c.l.b16 %v65
  %v168 = vunpack.c.l.b16 %v66
  %v169 = vunpack.c.l.b16 %v67
  %v170 = vunpack.c.l.b16 %v68
  %v171 = vunpack.c.l.b16 %v69
  %v172 = vunpack.c.l.b16 %v70
  %v173 = vunpack.c.l.b16 %v71
  %v174 = vunpack.c.l.b16 %v72
  %v175 = vunpack.c.l.b16 %v73
  %v176 = vunpack.c.l.b16 %v74
  %v177 = vunpack.c.l.b16 %v75
  %v178 = vunpack.c.l.b16 %v76
  %v179 = vpack.c.b16 %v130, %v129
  %v180 = vpack.c.b16 %v132, %v131
  %v181 = vpack.c.b16 %v134, %v133
  %v182 = vpack.c.b16 %v136, %v135
  %v183 = vpack.c.b16 %v138, %v137
  %v184 = vpack.c.b16 %v140, %v139
  %v185 = vpack.c.b16 %v142, %v141
  %v186 = vpack.c.b16 %v144, %v143
  %v187 = vpack.c.b16 %v146, %v145
  %v188 = vpack.c.b16 %v148, %v147
  %v189 = vpack.c.b16 %v150, %v149
  %v190 = vpack.c.b16 %v152, %v151
  %v191 = vpack.c.b16 %v154, %v153
  %v192 = vpack.c.b16 %v156, %v155
  %v193 = vpack.c.b16 %v158, %v157
  %v194 = vpack.c.b16 %v160, %v159
  %v195 = vpack.c.b16 %v162, %v161
  %v196 = vpack.c.b16 %v164, %v163
  %v197 = vpack.c.b16 %v166, %v165
  %v198 = vpack.c.b16 %v168, %v167
  %v199 = vpack.c.b16 %v170, %v169
  %v200 = vpack.c.b16 %v172, %v171
  %v201 = vpack.c.b16 %v174, %v173
  %v202 = vpack.c.b16 %v176, %v175
  %v203 = vpack.c.b16 %v178, %v177
  %vm229 = vcmask 130048
  %v231 = vsel %vm229, %v26, 0
  %233 = vmatpush.bf16.msra.mxu0 %v186
  %234 = vmatpush.bf16.msra.mxu0 %v185
  %235 = vmatpush.bf16.msra.mxu0 %v184
  %236 = vmatpush.bf16.msra.mxu0 %v183
  %237 = vmatpush.bf16.msra.mxu0 %v182
  %238 = vmatpush.bf16.msra.mxu0 %v181
  %239 = vmatpush.bf16.msra.mxu0 %v180
  %240 = vmatpush.bf16.msra.mxu0 %v179
  %241 = vmatmul.bf16.gmra.mxu0 %v23
  %v242 = vpop.f32.mrf.mxu0
  %v243 = vadd.f32 %v78, %v242
  %v244 = vpop.f32.mrf.mxu0
  %v245 = vadd.f32 %v78, %v244
  %246 = vdwg.mxu0
  %247 = vmatpush.bf16.msra.mxu0 %v194
  %248 = vmatpush.bf16.msra.mxu0 %v193
  %249 = vmatpush.bf16.msra.mxu0 %v192
  %250 = vmatpush.bf16.msra.mxu0 %v191
  %251 = vmatpush.bf16.msra.mxu0 %v190
  %252 = vmatpush.bf16.msra.mxu0 %v189
  %253 = vmatpush.bf16.msra.mxu0 %v188
  %254 = vmatpush.bf16.msra.mxu0 %v187
  %255 = vmatmul.bf16.gmra.mxu0 %v24
  %v256 = vpop.f32.mrf.mxu0
  %v257 = vadd.f32 %v243, %v256
  %v258 = vpop.f32.mrf.mxu0
  %v259 = vadd.f32 %v245, %v258
  %260 = vdwg.mxu0
  %261 = vmatpush.bf16.msra.mxu0 %v202
  %262 = vmatpush.bf16.msra.mxu0 %v201
  %263 = vmatpush.bf16.msra.mxu0 %v200
  %264 = vmatpush.bf16.msra.mxu0 %v199
  %265 = vmatpush.bf16.msra.mxu0 %v198
  %266 = vmatpush.bf16.msra.mxu0 %v197
  %267 = vmatpush.bf16.msra.mxu0 %v196
  %268 = vmatpush.bf16.msra.mxu0 %v195
  %269 = vmatmul.bf16.gmra.mxu0 %v25
  %v270 = vpop.f32.mrf.mxu0
  %v271 = vadd.f32 %v257, %v270
  %v272 = vpop.f32.mrf.mxu0
  %v273 = vadd.f32 %v259, %v272
  %274 = vdwg.mxu0
  %275 = vmatpush.bf16.msra.mxu0 0
  %276 = vmatpush.bf16.msra.mxu0 0
  %277 = vmatpush.bf16.msra.mxu0 0
  %278 = vmatpush.bf16.msra.mxu0 0
  %279 = vmatpush.bf16.msra.mxu0 0
  %280 = vmatpush.bf16.msra.mxu0 0
  %281 = vmatpush.bf16.msra.mxu0 0
  %282 = vmatpush.bf16.msra.mxu0 %v203
  %283 = vmatmul.bf16.gmra.mxu0 %v231
  %v284 = vpop.f32.mrf.mxu0
  %v285 = vadd.f32 %v271, %v284
  %v286 = vpop.f32.mrf.mxu0
  %v287 = vadd.f32 %v273, %v286
  %288 = vdwg.mxu0
  %v289 = vmax.f32 %v285, 0.0
  %v290 = vmax.f32 %v287, 0.0
  %v291 = vld [vmem:[%s2 + $0x1] sm:$0xff]
  %v292 = vld [vmem:[%s2 + $0x9] sm:$0xff]
  %v293 = vld [vmem:[%s2 + $0x11] sm:$0xff]
  %v294 = vld [vmem:[%s2 + $0x19] sm:$0xff]
  %v295 = vld [vmem:[%s2 + $0x21] sm:$0xff]
  %v296 = vld [vmem:[%s2 + $0x29] sm:$0x1]
  %v297 = vperm.slane %v296, 0
  %vm298 = vcmask 326656
  %v300 = vsel %vm298, %v289, 0
  %v303 = vsel %vm298, %v290, 0
  %305 = vmatpush.msra.mxu0 0.0
  %306 = vmatpush.msra.mxu0 0.0
  %307 = vmatpush.msra.mxu0 0.0
  %308 = vmatpush.msra.mxu0 0.0
  %309 = vmatpush.msra.mxu0 0.0
  %310 = vmatpush.msra.mxu0 0.0
  %311 = vmatpush.msra.mxu0 0.0
  %312 = vmatpush.msra.mxu0 0.0
  %313 = vmatpush.msra.mxu0 0.0
  %314 = vmatpush.msra.mxu0 0.0
  %315 = vmatpush.msra.mxu0 0.0
  %316 = vmatpush.msra.mxu0 %v295
  %317 = vmatpush.msra.mxu0 %v294
  %318 = vmatpush.msra.mxu0 %v293
  %319 = vmatpush.msra.mxu0 %v292
  %320 = vmatpush.msra.mxu0 %v291
  %321 = vmatmul.f32.gmra.mxu0 %v300
  %v322 = vpop.f32.mrf.mxu0
  %v323 = vadd.f32 %v297, %v322
  %324 = vmatmul.f32.gmra.mxu0 %v303
  %v325 = vpop.f32.mrf.mxu0
  %v326 = vadd.f32 %v297, %v325
  %327 = vdwg.mxu0
  %v328 = vmax.f32 %v323, 0.0
  %v329 = vmax.f32 %v326, 0.0
  %v330 = vld [vmem:[%s2 + $0x2a] sm:$0xf]
  %v331 = vld [vmem:[%s2 + $0x2e] sm:$0x1]
  %v332 = vperm.slane %v331, 0
  %vm333 = vcmask 31744
  %v335 = vsel %vm333, %v328, 0
  %v338 = vsel %vm333, %v329, 0
  %vm340 = vcmask 1043456
  %v342 = vsel %vm340, %v330, 0
  %344 = vmatpush.msra.mxu0 0.0
  %345 = vmatpush.msra.mxu0 0.0
  %346 = vmatpush.msra.mxu0 0.0
  %347 = vmatpush.msra.mxu0 0.0
  %348 = vmatpush.msra.mxu0 0.0
  %349 = vmatpush.msra.mxu0 0.0
  %350 = vmatpush.msra.mxu0 0.0
  %351 = vmatpush.msra.mxu0 0.0
  %352 = vmatpush.msra.mxu0 0.0
  %353 = vmatpush.msra.mxu0 0.0
  %354 = vmatpush.msra.mxu0 0.0
  %355 = vmatpush.msra.mxu0 0.0
  %356 = vmatpush.msra.mxu0 0.0
  %357 = vmatpush.msra.mxu0 0.0
  %358 = vmatpush.msra.mxu0 0.0
  %359 = vmatpush.msra.mxu0 %v342
  %360 = vmatmul.f32.gmra.mxu0 %v335
  %v361 = vpop.f32.mrf.mxu0
  %v362 = vadd.f32 %v332, %v361
  %363 = vmatmul.f32.gmra.mxu0 %v338
  %v364 = vpop.f32.mrf.mxu0
  %v365 = vadd.f32 %v332, %v364
  %366 = vdwg.mxu0
  %367 = vst [vmem:[%s3] sm:$0xff] %v362
  %368 = vst [vmem:[%s3 + $0x8] sm:$0xff] %v365
  // Predicated region
  $region14: #{mlp_classifier_forward.1} parent=0 // pred_check
    _
  $region15: #{mlp_classifier_forward.1} parent=0 // pred_check_branch
    %370 = sbr.rel (0) target = $region17
  $region16: #{mlp_classifier_forward.1} parent=0 // pred_region
    _
  $region17: #{mlp_classifier_forward.1} parent=0 // pred_fallthru
    _
  // Predicated region
  $region18: #{mlp_classifier_forward.1} parent=0 // pred_check
    _
  $region19: #{mlp_classifier_forward.1} parent=0 // pred_check_branch
    %372 = sbr.rel (0) target = $region21
  $region20: #{mlp_classifier_forward.1} parent=0 // pred_region
    _
  $region21: #{mlp_classifier_forward.1} parent=0 // pred_fallthru
    _

</llo_original>
